<compile_context>
chip_gen: v7x
topology: tpu7x:2x2x1
jax: 0.10.0
libtpu: 0.0.40
codegen_flags: <defaults>
</compile_context>

<pallas_src>
import jax
import jax.numpy as jnp
from jax.experimental import pallas as pl
from jax.experimental.pallas import tpu as pltpu


def _round_up(x, m):
    return (x + m - 1) // m * m


# ---------------------------------------------------------------------------
# Kernel: one fused matmul + gate nonlinearities, everything in f32.
# ---------------------------------------------------------------------------
def lstm_cell_kernel(xh_ref, w_ref, b_ref, c_ref, hy_ref, cy_ref):
    # gates = [x, h] @ W_packed + (b_ih + b_hh)      (single MXU call)
    gates = (
        jnp.dot(xh_ref[...], w_ref[...], preferred_element_type=jnp.float32)
        + b_ref[...]
    )
    Hp = hy_ref.shape[1]                               # lane-aligned (multiple of 128)
    ingate     = jax.nn.sigmoid(gates[:, 0 * Hp:1 * Hp])
    forgetgate = jax.nn.sigmoid(gates[:, 1 * Hp:2 * Hp])
    cellgate   = jnp.tanh(gates[:, 2 * Hp:3 * Hp])
    outgate    = jax.nn.sigmoid(gates[:, 3 * Hp:4 * Hp])

    cy = forgetgate * c_ref[...] + ingate * cellgate
    hy = outgate * jnp.tanh(cy)

    cy_ref[...] = cy.astype(cy_ref.dtype)
    hy_ref[...] = hy.astype(hy_ref.dtype)


# ---------------------------------------------------------------------------
# One-time parameter packing (do this at init time, NOT per step).
# ---------------------------------------------------------------------------
def prepare_lstm_cell_params(weight_ih, weight_hh, bias_ih, bias_hh):
    """Pack torch-layout LSTMCell params into a single MXU-friendly weight.

    Returns:
      w_packed: (Kp, 4*Hp) f32,  Kp = round_up(I+H, 8),  Hp = round_up(H, 128)
      b_packed: (1, 4*Hp)   f32  (bias_ih + bias_hh, gate-padded)
    Gate g occupies lanes [g*Hp, g*Hp + H)  -> every gate slice is 128-lane aligned.
    """
    fourH, I = weight_ih.shape
    H = weight_hh.shape[1]
    assert fourH == 4 * H
    Hp = _round_up(H, 128)
    K = I + H
    Kp = _round_up(K, 8)

    # (4H, I) ++ (4H, H) -> (4H, K) -> transpose -> (K, 4H)
    w = jnp.concatenate([weight_ih, weight_hh], axis=1).T
    # Pad each gate's lane block H -> Hp and the contraction dim K -> Kp.
    w = w.reshape(K, 4, H)
    w = jnp.pad(w, ((0, Kp - K), (0, 0), (0, Hp - H)))
    w_packed = w.reshape(Kp, 4 * Hp).astype(jnp.float32)

    b = (bias_ih + bias_hh).reshape(4, H)
    b_packed = jnp.pad(b, ((0, 0), (0, Hp - H))).reshape(1, 4 * Hp).astype(jnp.float32)
    return w_packed, b_packed, I, H


# ---------------------------------------------------------------------------
# Forward wrapper.
# ---------------------------------------------------------------------------
def lstm_cell_forward(x, state, w_packed, b_packed, hidden_size):
    """Pallas LSTMCell forward. Returns (hy, (hy, cy)) like the torch module."""
    hx, cx = state
    B, I = x.shape
    H = hidden_size
    Kp, fourHp = w_packed.shape
    Hp = fourHp // 4
    K = I + H

    # Batch tiling: one lane-dense block per grid step; weights stay resident.
    Bt = min(_round_up(B, 8), 256)
    Bp = _round_up(B, Bt)
    num_bt = Bp // Bt

    # Per-call glue on small activations only (weights were packed once).
    xh = jnp.concatenate([x, hx], axis=1).astype(jnp.float32)         # (B, K)
    xh = jnp.pad(xh, ((0, Bp - B), (0, Kp - K)))                      # (Bp, Kp)
    cxp = jnp.pad(cx.astype(jnp.float32), ((0, Bp - B), (0, Hp - H))) # (Bp, Hp)

    flops = 2 * Bp * Kp * (4 * Hp)
    transcendentals = 5 * Bp * Hp         # 3 sigmoid + 2 tanh per hidden element
    bytes_accessed = 4 * (xh.size + w_packed.size + b_packed.size
                          + cxp.size + 2 * Bp * Hp)
    cost = pl.CostEstimate(flops=int(flops),
                           transcendentals=int(transcendentals),
                           bytes_accessed=int(bytes_accessed))

    # VMEM budget: double-buffered per-tile activations + resident weights.
    vmem_need = 4 * (2 * (Bt * Kp + 3 * Bt * Hp) + Kp * 4 * Hp + 4 * Hp)
    vmem_limit = int(min(max(2 * vmem_need, 16 * 1024 * 1024), 48 * 1024 * 1024))

    hy_p, cy_p = pl.pallas_call(
        lstm_cell_kernel,
        out_shape=(
            jax.ShapeDtypeStruct((Bp, Hp), x.dtype),
            jax.ShapeDtypeStruct((Bp, Hp), x.dtype),
        ),
        grid=(num_bt,),
        in_specs=[
            pl.BlockSpec((Bt, Kp), lambda i: (i, 0)),        # [x, h] tile
            pl.BlockSpec((Kp, 4 * Hp), lambda i: (0, 0)),    # weights: constant block
            pl.BlockSpec((1, 4 * Hp), lambda i: (0, 0)),     # fused bias
            pl.BlockSpec((Bt, Hp), lambda i: (i, 0)),        # c tile
        ],
        out_specs=(
            pl.BlockSpec((Bt, Hp), lambda i: (i, 0)),        # hy (lane-dense)
            pl.BlockSpec((Bt, Hp), lambda i: (i, 0)),        # cy (lane-dense)
        ),
        compiler_params=pltpu.CompilerParams(
            dimension_semantics=("parallel",),
            vmem_limit_bytes=vmem_limit,
        ),
        cost_estimate=cost,
    )(xh, w_packed, b_packed, cxp)

    hy = hy_p[:B, :H]
    cy = cy_p[:B, :H]
    return hy, (hy, cy)


# ---------------------------------------------------------------------------
# Pure-JAX reference (exact math), matches the torch module.
# ---------------------------------------------------------------------------
def lstm_cell_reference(x, state, weight_ih, weight_hh, bias_ih, bias_hh):
    hx, cx = state
    gates = x @ weight_ih.T + bias_ih + hx @ weight_hh.T + bias_hh
    i, f, g, o = jnp.split(gates, 4, axis=1)
    i = jax.nn.sigmoid(i)
    f = jax.nn.sigmoid(f)
    g = jnp.tanh(g)
    o = jax.nn.sigmoid(o)
    cy = f * cx + i * g
    hy = o * jnp.tanh(cy)
    return hy, (hy, cy)


if __name__ == "__main__":
    input_size = 32
    hidden_size = 32
    batch = 8

    key = jax.random.PRNGKey(0)
    k_wih, k_whh, k_bih, k_bhh, k_x, k_h, k_c = jax.random.split(key, 7)

    # Deterministic synthetic parameters (same shapes as the torch module).
    weight_ih = jax.random.normal(k_wih, (4 * hidden_size, input_size), jnp.float32)
    weight_hh = jax.random.normal(k_whh, (4 * hidden_size, hidden_size), jnp.float32)
    bias_ih = jax.random.normal(k_bih, (4 * hidden_size,), jnp.float32)
    bias_hh = jax.random.normal(k_bhh, (4 * hidden_size,), jnp.float32)

    x = jax.random.normal(k_x, (batch, input_size), jnp.float32)
    hx = jax.random.normal(k_h, (batch, hidden_size), jnp.float32)
    cx = jax.random.normal(k_c, (batch, hidden_size), jnp.float32)

    # One-time layout prep (init time, not per step).
    w_packed, b_packed, _, _ = prepare_lstm_cell_params(
        weight_ih, weight_hh, bias_ih, bias_hh)

    hy, (hy2, cy) = lstm_cell_forward(x, (hx, cx), w_packed, b_packed, hidden_size)
    jax.block_until_ready((hy, cy))

    hy_ref, (_, cy_ref) = lstm_cell_reference(x, (hx, cx), weight_ih, weight_hh,
                                              bias_ih, bias_hh)

    assert hy.shape == (batch, hidden_size) and cy.shape == (batch, hidden_size)
    # Exact sigmoid/tanh in-kernel -> only f32 matmul rounding differences remain.
    assert jnp.allclose(hy, hy_ref, atol=1e-3, rtol=1e-3), (
        "hy mismatch, max abs diff = %e" % float(jnp.max(jnp.abs(hy - hy_ref))))
    assert jnp.allclose(cy, cy_ref, atol=1e-3, rtol=1e-3), (
        "cy mismatch, max abs diff = %e" % float(jnp.max(jnp.abs(cy - cy_ref))))

    print("KERNEL_OK")
</pallas_src>

<mosaic_0001>
module attributes {stable_mosaic.version = 11 : i64} {
  func.func @lstm_cell_kernel(%arg0: i32, %arg1: memref<8x64xf32, #tpu.memory_space<vmem>>, %arg2: memref<64x512xf32, #tpu.memory_space<vmem>>, %arg3: memref<1x512xf32, #tpu.memory_space<vmem>>, %arg4: memref<8x128xf32, #tpu.memory_space<vmem>>, %arg5: memref<8x128xf32, #tpu.memory_space<vmem>>, %arg6: memref<8x128xf32, #tpu.memory_space<vmem>>) attributes {dimension_semantics = [#tpu.dimension_semantics<parallel>], iteration_bounds = array<i64: 1>, scalar_prefetch = 0 : i64, scratch_operands = 0 : i64, tpu.core_type = #tpu.core_type<tc>, window_params = [{transform_indices = @transform_0, window_bounds = array<i64: 8, 64>}, {pipeline_mode = #tpu.pipeline_mode<synchronous>, transform_indices = @transform_1, window_bounds = array<i64: 64, 512>}, {pipeline_mode = #tpu.pipeline_mode<synchronous>, transform_indices = @transform_2, window_bounds = array<i64: 1, 512>}, {transform_indices = @transform_3, window_bounds = array<i64: 8, 128>}, {transform_indices = @transform_4, window_bounds = array<i64: 8, 128>}, {transform_indices = @transform_5, window_bounds = array<i64: 8, 128>}]} {
    %c0 = arith.constant 0 : index
    %c0_0 = arith.constant 0 : index
    %0 = vector.load %arg1[%c0, %c0_0] : memref<8x64xf32, #tpu.memory_space<vmem>>, vector<8x64xf32>
    %c0_1 = arith.constant 0 : index
    %c0_2 = arith.constant 0 : index
    %1 = vector.load %arg2[%c0_1, %c0_2] : memref<64x512xf32, #tpu.memory_space<vmem>>, vector<64x512xf32>
    %cst = arith.constant dense<0.000000e+00> : vector<8x512xf32>
    %2 = tpu.matmul %0, %1, %cst {dimension_numbers = #tpu.dot_dimension_numbers<[1], [0], [0], [1], [0, 0, 1, 1], [], []>} : vector<8x64xf32>, vector<64x512xf32>, vector<8x512xf32> -> vector<8x512xf32>
    %c0_3 = arith.constant 0 : index
    %c0_4 = arith.constant 0 : index
    %3 = vector.load %arg3[%c0_3, %c0_4] : memref<1x512xf32, #tpu.memory_space<vmem>>, vector<1x512xf32>
    %4 = vector.broadcast %3 : vector<1x512xf32> to vector<8x512xf32>
    %5 = arith.addf %2, %4 : vector<8x512xf32>
    %6 = vector.extract_strided_slice %5 {offsets = [0, 0], sizes = [8, 128], strides = [1, 1]} : vector<8x512xf32> to vector<8x128xf32>
    %7 = arith.negf %6 : vector<8x128xf32>
    %8 = math.exp %7 : vector<8x128xf32>
    %cst_5 = arith.constant 1.000000e+00 : f32
    %9 = vector.broadcast %cst_5 : f32 to vector<8x128xf32>
    %10 = arith.addf %9, %8 : vector<8x128xf32>
    %11 = arith.divf %9, %10 : vector<8x128xf32>
    %12 = vector.extract_strided_slice %5 {offsets = [0, 128], sizes = [8, 128], strides = [1, 1]} : vector<8x512xf32> to vector<8x128xf32>
    %13 = arith.negf %12 : vector<8x128xf32>
    %14 = math.exp %13 : vector<8x128xf32>
    %cst_6 = arith.constant 1.000000e+00 : f32
    %15 = vector.broadcast %cst_6 : f32 to vector<8x128xf32>
    %16 = arith.addf %15, %14 : vector<8x128xf32>
    %17 = arith.divf %15, %16 : vector<8x128xf32>
    %18 = vector.extract_strided_slice %5 {offsets = [0, 256], sizes = [8, 128], strides = [1, 1]} : vector<8x512xf32> to vector<8x128xf32>
    %19 = math.tanh %18 : vector<8x128xf32>
    %20 = vector.extract_strided_slice %5 {offsets = [0, 384], sizes = [8, 128], strides = [1, 1]} : vector<8x512xf32> to vector<8x128xf32>
    %21 = arith.negf %20 : vector<8x128xf32>
    %22 = math.exp %21 : vector<8x128xf32>
    %cst_7 = arith.constant 1.000000e+00 : f32
    %23 = vector.broadcast %cst_7 : f32 to vector<8x128xf32>
    %24 = arith.addf %23, %22 : vector<8x128xf32>
    %25 = arith.divf %23, %24 : vector<8x128xf32>
    %c0_8 = arith.constant 0 : index
    %c0_9 = arith.constant 0 : index
    %26 = vector.load %arg4[%c0_8, %c0_9] : memref<8x128xf32, #tpu.memory_space<vmem>>, vector<8x128xf32>
    %27 = arith.mulf %17, %26 : vector<8x128xf32>
    %28 = arith.mulf %11, %19 : vector<8x128xf32>
    %29 = arith.addf %27, %28 : vector<8x128xf32>
    %30 = math.tanh %29 : vector<8x128xf32>
    %31 = arith.mulf %25, %30 : vector<8x128xf32>
    %c0_10 = arith.constant 0 : index
    %c0_11 = arith.constant 0 : index
    %32 = vector.load %arg6[%c0_10, %c0_11] : memref<8x128xf32, #tpu.memory_space<vmem>>, vector<8x128xf32>
    tpu.vector_store %arg6[%c0_10, %c0_11], %29 {strides = array<i32>} : memref<8x128xf32, #tpu.memory_space<vmem>>, vector<8x128xf32>,
    %c0_12 = arith.constant 0 : index
    %c0_13 = arith.constant 0 : index
    %33 = vector.load %arg5[%c0_12, %c0_13] : memref<8x128xf32, #tpu.memory_space<vmem>>, vector<8x128xf32>
    tpu.vector_store %arg5[%c0_12, %c0_13], %31 {strides = array<i32>} : memref<8x128xf32, #tpu.memory_space<vmem>>, vector<8x128xf32>,
    return
  }
  func.func @transform_0(%arg0: i32) -> (i32, i32) {
    %c0_i32 = arith.constant 0 : i32
    %c0_i32_0 = arith.constant 0 : i32
    return %arg0, %c0_i32 : i32, i32
  }
  func.func @transform_1(%arg0: i32) -> (i32, i32) {
    %c0_i32 = arith.constant 0 : i32
    %c0_i32_0 = arith.constant 0 : i32
    %c0_i32_1 = arith.constant 0 : i32
    return %c0_i32, %c0_i32_0 : i32, i32
  }
  func.func @transform_2(%arg0: i32) -> (i32, i32) {
    %c0_i32 = arith.constant 0 : i32
    %c0_i32_0 = arith.constant 0 : i32
    %c0_i32_1 = arith.constant 0 : i32
    return %c0_i32, %c0_i32_0 : i32, i32
  }
  func.func @transform_3(%arg0: i32) -> (i32, i32) {
    %c0_i32 = arith.constant 0 : i32
    %c0_i32_0 = arith.constant 0 : i32
    return %arg0, %c0_i32 : i32, i32
  }
  func.func @transform_4(%arg0: i32) -> (i32, i32) {
    %c0_i32 = arith.constant 0 : i32
    %c0_i32_0 = arith.constant 0 : i32
    return %arg0, %c0_i32 : i32, i32
  }
  func.func @transform_5(%arg0: i32) -> (i32, i32) {
    %c0_i32 = arith.constant 0 : i32
    %c0_i32_0 = arith.constant 0 : i32
    return %arg0, %c0_i32 : i32, i32
  }
}

</mosaic_0001>

<llo_original>
// kernel: tpu_custom_call.1
$region0: #{tpu_custom_call.1}
  #allocation0 [shape = 'u32[]', space=smem, size = 0x4, offset = 0x4, fixed_abs, tag = 'smem constant byte address 0x4 - core index']
  #allocation1 [shape = 'u32[144,128]{1,0:T(1,128)}', space=vmem, size = 0x12000, scoped, tag = 'internal scratch']
  %s0 = inlined_call_operand.hbm [shape: f32[8,64], index: 0, kind: input, shape index: {}]
  %s1 = inlined_call_operand.hbm [shape: f32[64,512], index: 1, kind: input, shape index: {}]
  %s2 = inlined_call_operand.hbm [shape: f32[1,512], index: 2, kind: input, shape index: {}]
  %s3 = inlined_call_operand.vmem [shape: f32[8,128], index: 3, kind: input, shape index: {}]
  %s4 = inlined_call_operand.hbm [shape: f32[8,128], index: 4, kind: output, shape index: {0}]
  %s5 = inlined_call_operand.hbm [shape: f32[8,128], index: 5, kind: output, shape index: {1}]
  %6 = xla_tuple %s4, %s5
  %s7 = sld [smem:[#allocation0]]
  $region46: #{tpu_custom_call.1} parent=0
    _
  %s9 = ssub.s32 1, %s7
  %s10 = scalar_select 0, %s9, %s7
  $region1: #{tpu_custom_call.1} parent=0
    #allocation2 [shape = 'u8[4096]{0}', space=vmem, size = 0x1000, scoped, tag = 'input window, operand 0, single buffered']
    #allocation3 [shape = 's32[1]{0}', space=sflag, size = 0x4, scoped, tag = 'scoped memory for tpu_custom_call.1']
    #allocation4 [shape = 's32[1]{0}', space=sflag, size = 0x4, scoped, tag = 'scoped memory for tpu_custom_call.1']
    #allocation5 [shape = 'u8[131072]{0}', space=vmem, size = 0x20000, scoped, tag = 'input window, operand 1, single buffered']
    #allocation6 [shape = 's32[1]{0}', space=sflag, size = 0x4, scoped, tag = 'scoped memory for tpu_custom_call.1']
    #allocation7 [shape = 'u8[2048]{0}', space=vmem, size = 0x800, scoped, tag = 'input window, operand 2, single buffered']
    #allocation8 [shape = 'u8[4096]{0}', space=vmem, size = 0x1000, scoped, tag = 'output window, operand 0, single buffered']
    #allocation9 [shape = 'u8[4096]{0}', space=vmem, size = 0x1000, scoped, tag = 'output window, operand 1, single buffered']
    #allocation10 [shape = 's32[1]{0}', space=sflag, size = 0x4, scoped, tag = 'scoped memory for tpu_custom_call.1']
    %11 = vsyncpa [#allocation3], 0
    %12 = vsyncpa [#allocation6], 0
    %13 = vsyncpa [#allocation4], 0
    %14 = vsyncpa [#allocation10], 0
    // Predicated region
    $region2: #{tpu_custom_call.1} parent=1 // pred_check
      _
    $region3: #{tpu_custom_call.1} parent=1 // pred_check_branch
      %16 = sbr.rel (0) target = $region5
    $region4: #{tpu_custom_call.1} parent=1 // pred_region
      %s18 = ssub.s32 128, 128
      %19 = vsyncadd [#allocation3], %s18
      %s21 = sshll.u32 [#allocation2], 4
      %s22 = int_to_ptr.vmem [resolvable:$true] %s21
      %24 = dma.hbm_to_vmem [thread:$0]  %s0, 128, %s22, [#allocation3]
    $region5: #{tpu_custom_call.1} parent=1 // pred_fallthru
      _
    // Predicated region
    $region6: #{tpu_custom_call.1} parent=1 // pred_check
      _
    $region7: #{tpu_custom_call.1} parent=1 // pred_check_branch
      %26 = sbr.rel (0) target = $region9
    $region8: #{tpu_custom_call.1} parent=1 // pred_region
      %s28 = ssub.s32 4096, 4096
      %29 = vsyncadd [#allocation6], %s28
      %s30 = sshll.u32 [#allocation5], 4
      %s31 = int_to_ptr.vmem [resolvable:$true] %s30
      %36 = dma.hbm_to_vmem [thread:$0]  %s1, 4096, %s31, [#allocation6], 512, 512, 32
    $region9: #{tpu_custom_call.1} parent=1 // pred_fallthru
      _
    // Predicated region
    $region10: #{tpu_custom_call.1} parent=1 // pred_check
      _
    $region11: #{tpu_custom_call.1} parent=1 // pred_check_branch
      %38 = sbr.rel (0) target = $region13
    $region12: #{tpu_custom_call.1} parent=1 // pred_region
      %s40 = ssub.s32 64, 64
      %41 = vsyncadd [#allocation6], %s40
      %s43 = sshll.u32 [#allocation7], 4
      %s44 = int_to_ptr.vmem [resolvable:$true] %s43
      %46 = dma.hbm_to_vmem [thread:$0]  %s2, 64, %s44, [#allocation6]
    $region13: #{tpu_custom_call.1} parent=1 // pred_fallthru
      _
    // Predicated region
    $region14: #{tpu_custom_call.1} parent=1 // pred_check
      _
    $region15: #{tpu_custom_call.1} parent=1 // pred_check_branch
      %48 = sbr.rel (0) target = $region17
    $region16: #{tpu_custom_call.1} parent=1 // pred_region
      _
    $region17: #{tpu_custom_call.1} parent=1 // pred_fallthru
      _
    // Predicated region
    $region18: #{tpu_custom_call.1} parent=1 // pred_check
      _
    $region19: #{tpu_custom_call.1} parent=1 // pred_check_branch
      %50 = sbr.rel (0) target = $region21
    $region20: #{tpu_custom_call.1} parent=1 // pred_region
      %51 = dma.done [#allocation3], 128
    $region21: #{tpu_custom_call.1} parent=1 // pred_fallthru
      _
    // Predicated region
    $region22: #{tpu_custom_call.1} parent=1 // pred_check
      _
    $region23: #{tpu_custom_call.1} parent=1 // pred_check_branch
      %53 = sbr.rel (0) target = $region25
    $region24: #{tpu_custom_call.1} parent=1 // pred_region
      %54 = dma.done [#allocation6], 4096
    $region25: #{tpu_custom_call.1} parent=1 // pred_fallthru
      _
    // Predicated region
    $region26: #{tpu_custom_call.1} parent=1 // pred_check
      _
    $region27: #{tpu_custom_call.1} parent=1 // pred_check_branch
      %56 = sbr.rel (0) target = $region29
    $region28: #{tpu_custom_call.1} parent=1 // pred_region
      %57 = dma.done [#allocation6], 64
    $region29: #{tpu_custom_call.1} parent=1 // pred_fallthru
      _
    %v58 = vld [vmem:[#allocation2] sm:$0xff]
    %v59 = vld [vmem:[#allocation5] sm:$0xff]
    %v60 = vld [vmem:[#allocation5 + $0x8] sm:$0xff]
    %v61 = vld [vmem:[#allocation5 + $0x10] sm:$0xff]
    %v62 = vld [vmem:[#allocation5 + $0x18] sm:$0xff]
    %v63 = vld [vmem:[#allocation5 + $0x20] sm:$0xff]
    %v64 = vld [vmem:[#allocation5 + $0x28] sm:$0xff]
    %v65 = vld [vmem:[#allocation5 + $0x30] sm:$0xff]
    %v66 = vld [vmem:[#allocation5 + $0x38] sm:$0xff]
    %v67 = vld [vmem:[#allocation5 + $0x40] sm:$0xff]
    %v68 = vld [vmem:[#allocation5 + $0x48] sm:$0xff]
    %v69 = vld [vmem:[#allocation5 + $0x50] sm:$0xff]
    %v70 = vld [vmem:[#allocation5 + $0x58] sm:$0xff]
    %v71 = vld [vmem:[#allocation5 + $0x60] sm:$0xff]
    %v72 = vld [vmem:[#allocation5 + $0x68] sm:$0xff]
    %v73 = vld [vmem:[#allocation5 + $0x70] sm:$0xff]
    %v74 = vld [vmem:[#allocation5 + $0x78] sm:$0xff]
    %v75 = vld [vmem:[#allocation5 + $0x80] sm:$0xff]
    %v76 = vld [vmem:[#allocation5 + $0x88] sm:$0xff]
    %v77 = vld [vmem:[#allocation5 + $0x90] sm:$0xff]
    %v78 = vld [vmem:[#allocation5 + $0x98] sm:$0xff]
    %v79 = vld [vmem:[#allocation5 + $0xa0] sm:$0xff]
    %v80 = vld [vmem:[#allocation5 + $0xa8] sm:$0xff]
    %v81 = vld [vmem:[#allocation5 + $0xb0] sm:$0xff]
    %v82 = vld [vmem:[#allocation5 + $0xb8] sm:$0xff]
    %v83 = vld [vmem:[#allocation5 + $0xc0] sm:$0xff]
    %v84 = vld [vmem:[#allocation5 + $0xc8] sm:$0xff]
    %v85 = vld [vmem:[#allocation5 + $0xd0] sm:$0xff]
    %v86 = vld [vmem:[#allocation5 + $0xd8] sm:$0xff]
    %v87 = vld [vmem:[#allocation5 + $0xe0] sm:$0xff]
    %v88 = vld [vmem:[#allocation5 + $0xe8] sm:$0xff]
    %v89 = vld [vmem:[#allocation5 + $0xf0] sm:$0xff]
    %v90 = vld [vmem:[#allocation5 + $0xf8] sm:$0xff]
    %v91 = vld [vmem:[#allocation7] sm:$0xf]
    %v93 = vlaneseq
    %v94 = vshrl.u32 %v93, 7
    %v95 = vsub.s32 0, %v94
    %v96 = vrot.slane %v91, %v95
    %v97 = vlaneseq
    %v98 = vshrl.u32 %v97, 7
    %v99 = vsub.s32 1, %v98
    %v100 = vrot.slane %v91, %v99
    %v101 = vlaneseq
    %v102 = vshrl.u32 %v101, 7
    %v103 = vsub.s32 2, %v102
    %v104 = vrot.slane %v91, %v103
    %v105 = vlaneseq
    %v106 = vshrl.u32 %v105, 7
    %v107 = vsub.s32 3, %v106
    %v108 = vrot.slane %v91, %v107
    %vm113 = vcmask 523264
    %v115 = vsel %vm113, %v58, 0
    %117 = vmatprep.subr.mxu0 %v60
    %118 = vmatpush1.msra.mxu0 %v59
    %119 = vmatprep.subr.mxu0 %v64
    %120 = vmatpush1.msra.mxu0 %v63
    %121 = vmatprep.subr.mxu0 %v68
    %122 = vmatpush1.msra.mxu0 %v67
    %123 = vmatprep.subr.mxu0 %v72
    %124 = vmatpush1.msra.mxu0 %v71
    %125 = vmatprep.subr.mxu0 %v76
    %126 = vmatpush1.msra.mxu0 %v75
    %127 = vmatprep.subr.mxu0 %v80
    %128 = vmatpush1.msra.mxu0 %v79
    %129 = vmatprep.subr.mxu0 %v84
    %130 = vmatpush1.msra.mxu0 %v83
    %131 = vmatprep.subr.mxu0 %v88
    %132 = vmatpush1.msra.mxu0 %v87
    %133 = vmatprep.subr.mxu0 0.0
    %134 = vmatpush1.msra.mxu0 0.0
    %135 = vmatprep.subr.mxu0 0.0
    %136 = vmatpush1.msra.mxu0 0.0
    %137 = vmatprep.subr.mxu0 0.0
    %138 = vmatpush1.msra.mxu0 0.0
    %139 = vmatprep.subr.mxu0 0.0
    %140 = vmatpush1.msra.mxu0 0.0
    %141 = vmatprep.subr.mxu0 0.0
    %142 = vmatpush1.msra.mxu0 0.0
    %143 = vmatprep.subr.mxu0 0.0
    %144 = vmatpush1.msra.mxu0 0.0
    %145 = vmatprep.subr.mxu0 0.0
    %146 = vmatpush1.msra.mxu0 0.0
    %147 = vmatprep.subr.mxu0 0.0
    %148 = vmatpush1.msra.mxu0 0.0
    %149 = vmatprep.subr.mxu0 0.0
    %150 = vmatpush1.msra.mxu0 0.0
    %151 = vmatprep.subr.mxu0 0.0
    %152 = vmatpush1.msra.mxu0 0.0
    %153 = vmatprep.subr.mxu0 0.0
    %154 = vmatpush1.msra.mxu0 0.0
    %155 = vmatprep.subr.mxu0 0.0
    %156 = vmatpush1.msra.mxu0 0.0
    %157 = vmatprep.subr.mxu0 0.0
    %158 = vmatpush1.msra.mxu0 0.0
    %159 = vmatprep.subr.mxu0 0.0
    %160 = vmatpush1.msra.mxu0 0.0
    %161 = vmatprep.subr.mxu0 0.0
    %162 = vmatpush1.msra.mxu0 0.0
    %163 = vmatprep.subr.mxu0 0.0
    %164 = vmatpush1.msra.mxu0 0.0
    %165 = vmatprep.subr.mxu0 0.0
    %166 = vmatpush1.msra.mxu0 0.0
    %167 = vmatprep.subr.mxu0 0.0
    %168 = vmatpush1.msra.mxu0 0.0
    %169 = vmatprep.subr.mxu0 0.0
    %170 = vmatpush1.msra.mxu0 0.0
    %171 = vmatprep.subr.mxu0 0.0
    %172 = vmatpush1.msra.mxu0 0.0
    %173 = vmatprep.subr.mxu0 0.0
    %174 = vmatpush1.msra.mxu0 0.0
    %175 = vmatprep.subr.mxu0 0.0
    %176 = vmatpush1.msra.mxu0 0.0
    %177 = vmatprep.subr.mxu0 0.0
    %178 = vmatpush1.msra.mxu0 0.0
    %179 = vmatprep.subr.mxu0 0.0
    %180 = vmatpush1.msra.mxu0 0.0
    %181 = vmatprep.mubr.f32.mxu0 0.0
    %182 = vmatmul.mubr.f32.gmra.mrb[0].mxu0 %v115
    %v183 = vpop.f32.mrb[0].mxu0
    %v184 = vadd.f32 %v96, %v183
    %v185 = vpop.f32.mrb[0].mxu0
    %v186 = vadd.f32 %v100, %v185
    %187 = vdwg.mxu0
    %188 = vmatprep.subr.mxu0 %v62
    %189 = vmatpush1.msra.mxu0 %v61
    %190 = vmatprep.subr.mxu0 %v66
    %191 = vmatpush1.msra.mxu0 %v65
    %192 = vmatprep.subr.mxu0 %v70
    %193 = vmatpush1.msra.mxu0 %v69
    %194 = vmatprep.subr.mxu0 %v74
    %195 = vmatpush1.msra.mxu0 %v73
    %196 = vmatprep.subr.mxu0 %v78
    %197 = vmatpush1.msra.mxu0 %v77
    %198 = vmatprep.subr.mxu0 %v82
    %199 = vmatpush1.msra.mxu0 %v81
    %200 = vmatprep.subr.mxu0 %v86
    %201 = vmatpush1.msra.mxu0 %v85
    %202 = vmatprep.subr.mxu0 %v90
    %203 = vmatpush1.msra.mxu0 %v89
    %204 = vmatprep.subr.mxu0 0.0
    %205 = vmatpush1.msra.mxu0 0.0
    %206 = vmatprep.subr.mxu0 0.0
    %207 = vmatpush1.msra.mxu0 0.0
    %208 = vmatprep.subr.mxu0 0.0
    %209 = vmatpush1.msra.mxu0 0.0
    %210 = vmatprep.subr.mxu0 0.0
    %211 = vmatpush1.msra.mxu0 0.0
    %212 = vmatprep.subr.mxu0 0.0
    %213 = vmatpush1.msra.mxu0 0.0
    %214 = vmatprep.subr.mxu0 0.0
    %215 = vmatpush1.msra.mxu0 0.0
    %216 = vmatprep.subr.mxu0 0.0
    %217 = vmatpush1.msra.mxu0 0.0
    %218 = vmatprep.subr.mxu0 0.0
    %219 = vmatpush1.msra.mxu0 0.0
    %220 = vmatprep.subr.mxu0 0.0
    %221 = vmatpush1.msra.mxu0 0.0
    %222 = vmatprep.subr.mxu0 0.0
    %223 = vmatpush1.msra.mxu0 0.0
    %224 = vmatprep.subr.mxu0 0.0
    %225 = vmatpush1.msra.mxu0 0.0
    %226 = vmatprep.subr.mxu0 0.0
    %227 = vmatpush1.msra.mxu0 0.0
    %228 = vmatprep.subr.mxu0 0.0
    %229 = vmatpush1.msra.mxu0 0.0
    %230 = vmatprep.subr.mxu0 0.0
    %231 = vmatpush1.msra.mxu0 0.0
    %232 = vmatprep.subr.mxu0 0.0
    %233 = vmatpush1.msra.mxu0 0.0
    %234 = vmatprep.subr.mxu0 0.0
    %235 = vmatpush1.msra.mxu0 0.0
    %236 = vmatprep.subr.mxu0 0.0
    %237 = vmatpush1.msra.mxu0 0.0
    %238 = vmatprep.subr.mxu0 0.0
    %239 = vmatpush1.msra.mxu0 0.0
    %240 = vmatprep.subr.mxu0 0.0
    %241 = vmatpush1.msra.mxu0 0.0
    %242 = vmatprep.subr.mxu0 0.0
    %243 = vmatpush1.msra.mxu0 0.0
    %244 = vmatprep.subr.mxu0 0.0
    %245 = vmatpush1.msra.mxu0 0.0
    %246 = vmatprep.subr.mxu0 0.0
    %247 = vmatpush1.msra.mxu0 0.0
    %248 = vmatprep.subr.mxu0 0.0
    %249 = vmatpush1.msra.mxu0 0.0
    %250 = vmatprep.subr.mxu0 0.0
    %251 = vmatpush1.msra.mxu0 0.0
    %252 = vmatprep.mubr.f32.mxu0 0.0
    %253 = vmatmul.mubr.f32.gmra.mrb[0].mxu0 %v115
    %v254 = vpop.f32.mrb[0].mxu0
    %v255 = vadd.f32 %v104, %v254
    %v256 = vpop.f32.mrb[0].mxu0
    %v257 = vadd.f32 %v108, %v256
    %258 = vdwg.mxu0
    %v259 = vxor.u32 %v184, 2147483648
    %v260 = vmul.f32 %v259, 1.442695
    %v261 = vpow.pop %v260
    %v262 = vadd.f32 %v261, 1.0
    %v263 = vrcp.pop %v262
    %v264 = vmul.f32 1.0, %v263
    %v265 = vxor.u32 %v186, 2147483648
    %v266 = vmul.f32 %v265, 1.442695
    %v267 = vpow.pop %v266
    %v268 = vadd.f32 %v267, 1.0
    %v269 = vrcp.pop %v268
    %v270 = vmul.f32 1.0, %v269
    %v271 = vtanh.pop %v255
    %v272 = vxor.u32 %v257, 2147483648
    %v273 = vmul.f32 %v272, 1.442695
    %v274 = vpow.pop %v273
    %v275 = vadd.f32 %v274, 1.0
    %v276 = vrcp.pop %v275
    %v277 = vmul.f32 1.0, %v276
    %v278 = vld [vmem:[%s3] sm:$0xff]
    %v279 = vmul.f32 %v270, %v278
    %v280 = vmul.f32 %v264, %v271
    %v281 = vadd.f32 %v279, %v280
    %v282 = vtanh.pop %v281
    %v283 = vmul.f32 %v277, %v282
    %284 = vst [vmem:[#allocation9] sm:$0xff] %v281
    %285 = vst [vmem:[#allocation8] sm:$0xff] %v283
    // Predicated region
    $region30: #{tpu_custom_call.1} parent=1 // pred_check
      _
    $region31: #{tpu_custom_call.1} parent=1 // pred_check_branch
      %287 = sbr.rel (0) target = $region33
    $region32: #{tpu_custom_call.1} parent=1 // pred_region
      %s289 = ssub.s32 128, 128
      %290 = vsyncadd [#allocation4], %s289
      %s292 = sshll.u32 [#allocation8], 4
      %s293 = int_to_ptr.vmem [resolvable:$true] %s292
      %295 = dma.vmem_to_hbm [thread:$0]  %s293, 128, %s4, [#allocation4]
    $region33: #{tpu_custom_call.1} parent=1 // pred_fallthru
      _
    // Predicated region
    $region34: #{tpu_custom_call.1} parent=1 // pred_check
      _
    $region35: #{tpu_custom_call.1} parent=1 // pred_check_branch
      %297 = sbr.rel (0) target = $region37
    $region36: #{tpu_custom_call.1} parent=1 // pred_region
      %s299 = ssub.s32 128, 128
      %300 = vsyncadd [#allocation10], %s299
      %s302 = sshll.u32 [#allocation9], 4
      %s303 = int_to_ptr.vmem [resolvable:$true] %s302
      %305 = dma.vmem_to_hbm [thread:$0]  %s303, 128, %s5, [#allocation10]
    $region37: #{tpu_custom_call.1} parent=1 // pred_fallthru
      _
    // Predicated region
    $region38: #{tpu_custom_call.1} parent=1 // pred_check
      _
    $region39: #{tpu_custom_call.1} parent=1 // pred_check_branch
      %307 = sbr.rel (0) target = $region41
    $region40: #{tpu_custom_call.1} parent=1 // pred_region
      %308 = dma.done [#allocation4], 128
    $region41: #{tpu_custom_call.1} parent=1 // pred_fallthru
      _
    // Predicated region
    $region42: #{tpu_custom_call.1} parent=1 // pred_check
      _
    $region43: #{tpu_custom_call.1} parent=1 // pred_check_branch
      %310 = sbr.rel (0) target = $region45
    $region44: #{tpu_custom_call.1} parent=1 // pred_region
      %311 = dma.done [#allocation10], 128
    $region45: #{tpu_custom_call.1} parent=1 // pred_fallthru
      _
    %312 = vsyncpa [#allocation3], 1
    %313 = vsyncpa [#allocation6], 1
    %314 = vsyncpa [#allocation4], 1
    %315 = vsyncpa [#allocation10], 1

</llo_original>
